<compile_context>
chip_gen: v7x
topology: tpu7x:2x2x1
jax: 0.10.0
libtpu: 0.0.40
codegen_flags: <defaults>
</compile_context>

<pallas_src>
import functools

import jax
import jax.numpy as jnp
from jax import lax
from jax.experimental import pallas as pl
from jax.experimental.pallas import tpu as pltpu


def _round_up(x, m):
    return ((x + m - 1) // m) * m


def _cdiv(a, b):
    return (a + b - 1) // b


# --------------------------------------------------------------------------
# Kernels
# --------------------------------------------------------------------------

def merge_kernel(x1_ref, x2_ref, w1a_ref, w1b_ref, b1_ref, w2_ref, b2_ref, o_ref):
    """One batch tile of cat -> fc1 -> ReLU -> fc2.

    Used both for the plain layout (x*: (tm, d*)) and the row-packed layout
    (x*: (tm/r, r*d*) with block-diagonal weights, r*d4 == 128); the math is
    identical, only shapes differ.
    """
    h = (jnp.dot(x1_ref[...], w1a_ref[...], preferred_element_type=jnp.float32)
         + jnp.dot(x2_ref[...], w1b_ref[...], preferred_element_type=jnp.float32)
         + b1_ref[...])
    h = jnp.maximum(h, 0.0)                               # ReLU
    o_ref[...] = (jnp.dot(h, w2_ref[...], preferred_element_type=jnp.float32)
                  + b2_ref[...]).astype(o_ref.dtype)


def merge_kernel_head(x1_ref, x2_ref, w1a_ref, w1b_ref, b1_ref,
                      w2_row_ref, b2_ref, o_ref):
    """dim4 == 1 head: fc2 as an MXU NT contraction -> lane-dense (tm,) output."""
    h = (jnp.dot(x1_ref[...], w1a_ref[...], preferred_element_type=jnp.float32)
         + jnp.dot(x2_ref[...], w1b_ref[...], preferred_element_type=jnp.float32)
         + b1_ref[...])
    h = jnp.maximum(h, 0.0)
    # (1, d3) x (tm, d3) contracting d3 -> (1, tm): already lane-dense, keeps
    # the per-row reduction off the VPU/XLU (same NT pattern as flash attn QK^T).
    s = lax.dot_general(w2_row_ref[...], h,
                        dimension_numbers=(((1,), (1,)), ((), ())),
                        preferred_element_type=jnp.float32)
    o_ref[...] = s[0] + b2_ref[0]


# --------------------------------------------------------------------------
# Wrapper
# --------------------------------------------------------------------------

def _pick_tile(B, tm):
    """Batch tile: big (amortize per-step overhead), multiple of 128, and
    split into >= 2 grid steps when B > 128 so both v7x TCs get work."""
    cap = _round_up(max(B, 1), 128)
    if B > 128:
        cap = min(cap, _round_up((B + 1) // 2, 128))
    return _round_up(min(tm, cap), 128)


def _x_spec(tile_rows, cols, input_buffers):
    if input_buffers != 2:
        # Optional deeper input pipelining (sweep 2 vs 3); off by default.
        return pl.BlockSpec((tile_rows, cols), lambda i: (i, 0),
                            pipeline_mode=pl.Buffered(input_buffers))
    return pl.BlockSpec((tile_rows, cols), lambda i: (i, 0))


@functools.partial(jax.jit, static_argnames=("tm", "input_buffers"))
def merge_forward(x1, x2, w1, b1, w2, b2, *, tm=2048, input_buffers=2):
    """MergeLayer forward: fc2(relu(fc1(cat([x1, x2], -1)))).

    w1: (d1 + d2, d3) (pre-transposed fc1.weight.T), b1: (1, d3)
    w2: (d3, d4),                                    b2: (1, d4)

    Compute dtype of the fc1 matmuls follows x1.dtype (pass bf16 activations
    to halve the dominant HBM read); accumulation and outputs are f32.
    """
    B, d1 = x1.shape
    B2, d2 = x2.shape
    assert B == B2, "x1/x2 batch mismatch"
    din, d3 = w1.shape
    assert din == d1 + d2
    d3b, d4 = w2.shape
    assert d3b == d3

    cdt = x1.dtype                      # compute dtype follows the activations
    x2 = x2.astype(cdt)                 # no-op in the expected case
    b1 = b1.astype(jnp.float32)
    b2 = b2.astype(jnp.float32)
    w2f = w2.astype(jnp.float32)

    # Fold the concat into fc1: cat(x1, x2) @ W1 == x1 @ W1a + x2 @ W1b.
    w1a = w1[:d1].astype(cdt)
    w1b = w1[d1:].astype(cdt)

    tm_eff = _pick_tile(B, tm)
    cparams = pltpu.CompilerParams(dimension_semantics=("parallel",))
    # Constant index_map -> parameter block stays resident in VMEM across grid.
    full2d = lambda arr: pl.BlockSpec(arr.shape, lambda i: (0, 0))

    if d4 == 1:
        # ---- scalar head (TGAT affinity score): lane-dense 1-D f32 output ----
        nblk = _cdiv(B, tm_eff)
        w2_row = w2f.reshape(1, d3)
        b2_s = b2.reshape(1)
        out = pl.pallas_call(
            merge_kernel_head,
            out_shape=jax.ShapeDtypeStruct((nblk * tm_eff,), jnp.float32),
            grid_spec=pltpu.PrefetchScalarGridSpec(
                num_scalar_prefetch=0,
                grid=(nblk,),
                in_specs=[
                    _x_spec(tm_eff, d1, input_buffers),
                    _x_spec(tm_eff, d2, input_buffers),
                    full2d(w1a), full2d(w1b), full2d(b1), full2d(w2_row),
                    pl.BlockSpec(memory_space=pltpu.MemorySpace.SMEM),  # scalar b2
                ],
                out_specs=pl.BlockSpec((tm_eff,), lambda i: (i,)),
            ),
            compiler_params=cparams,
        )(x1, x2, w1a, w1b, b1, w2_row, b2_s)
        return out[:B].reshape(B, 1)

    # ---- generic head ----
    # Lane-dense output by packing r = 128 // d4 consecutive batch rows into
    # one 128-lane "super row".  x1/x2 packing is a free row-major reshape in
    # the wrapper (no extra HBM pass); the block-diagonal weights are tiny and
    # VMEM-resident.  r is capped so the replicated weights stay small.
    r = 128 // d4 if (0 < d4 < 128 and 128 % d4 == 0) else 1
    use_packed = (1 < r <= 8 and B % r == 0
                  and tm_eff % r == 0 and (tm_eff // r) % 8 == 0)

    if use_packed:
        tmp_rows = tm_eff // r
        b4 = B // r
        nblk = _cdiv(b4, tmp_rows)
        eye = jnp.eye(r, dtype=jnp.float32)
        w1a_blk = jnp.kron(eye, w1[:d1].astype(jnp.float32)).astype(cdt)  # (r*d1, r*d3)
        w1b_blk = jnp.kron(eye, w1[d1:].astype(jnp.float32)).astype(cdt)  # (r*d2, r*d3)
        w2_blk = jnp.kron(eye, w2f)                                       # (r*d3, 128)
        b1_blk = jnp.tile(b1, (1, r))                                     # (1, r*d3)
        b2_blk = jnp.tile(b2, (1, r))                                     # (1, 128)
        x1p = x1.reshape(b4, r * d1)    # contiguous row-major -> free reshape
        x2p = x2.reshape(b4, r * d2)
        out = pl.pallas_call(
            merge_kernel,
            out_shape=jax.ShapeDtypeStruct((nblk * tmp_rows, r * d4), jnp.float32),
            grid_spec=pltpu.PrefetchScalarGridSpec(
                num_scalar_prefetch=0,
                grid=(nblk,),
                in_specs=[
                    _x_spec(tmp_rows, r * d1, input_buffers),
                    _x_spec(tmp_rows, r * d2, input_buffers),
                    full2d(w1a_blk), full2d(w1b_blk), full2d(b1_blk),
                    full2d(w2_blk), full2d(b2_blk),
                ],
                out_specs=pl.BlockSpec((tmp_rows, r * d4), lambda i: (i, 0)),
            ),
            compiler_params=cparams,
        )(x1p, x2p, w1a_blk, w1b_blk, b1_blk, w2_blk, b2_blk)
        return out.reshape(-1, d4)[:B]

    # Fallback: plain (tm, d4) blocks (already lane-dense when d4 % 128 == 0;
    # awkward d4 or B % r != 0 take masked stores but stay correct).
    nblk = _cdiv(B, tm_eff)
    out = pl.pallas_call(
        merge_kernel,
        out_shape=jax.ShapeDtypeStruct((nblk * tm_eff, d4), jnp.float32),
        grid_spec=pltpu.PrefetchScalarGridSpec(
            num_scalar_prefetch=0,
            grid=(nblk,),
            in_specs=[
                _x_spec(tm_eff, d1, input_buffers),
                _x_spec(tm_eff, d2, input_buffers),
                full2d(w1a), full2d(w1b), full2d(b1),
                full2d(w2f), full2d(b2),
            ],
            out_specs=pl.BlockSpec((tm_eff, d4), lambda i: (i, 0)),
        ),
        compiler_params=cparams,
    )(x1, x2, w1a, w1b, b1, w2f, b2)
    return out[:B]


# ------------------------ init + reference ------------------------

def xavier_normal(key, fan_in, fan_out):
    # torch.nn.init.xavier_normal_: std = sqrt(2 / (fan_in + fan_out)).
    std = (2.0 / (fan_in + fan_out)) ** 0.5
    return std * jax.random.normal(key, (fan_in, fan_out), dtype=jnp.float32)


def uniform_bias(key, fan_in, fan_out):
    # torch.nn.Linear default bias init: U(-1/sqrt(fan_in), 1/sqrt(fan_in)).
    bound = 1.0 / (fan_in ** 0.5)
    return jax.random.uniform(key, (1, fan_out), dtype=jnp.float32,
                              minval=-bound, maxval=bound)


def reference_forward(x1, x2, w1, b1, w2, b2):
    x = jnp.concatenate([x1, x2], axis=-1)
    h = jnp.maximum(x @ w1 + b1, 0.0)
    return h @ w2 + b2


if __name__ == "__main__":
    dim1, dim2, dim3, dim4 = 32, 32, 64, 32
    batch = 16

    keys = jax.random.split(jax.random.PRNGKey(0), 10)
    (kx1, kx2, kw1, kb1, kw2, kb2, kw2h, kb2h, kx1o, kx2o) = keys

    x1 = jax.random.normal(kx1, (batch, dim1), dtype=jnp.float32)
    x2 = jax.random.normal(kx2, (batch, dim2), dtype=jnp.float32)

    w1 = xavier_normal(kw1, dim1 + dim2, dim3)
    b1 = uniform_bias(kb1, dim1 + dim2, dim3)
    w2 = xavier_normal(kw2, dim3, dim4)
    b2 = uniform_bias(kb2, dim3, dim4)

    # Case 1: generic head (dim4=32), B % 4 == 0 -> packed lane-dense output path.
    out = jax.block_until_ready(merge_forward(x1, x2, w1, b1, w2, b2))
    ref = reference_forward(x1, x2, w1, b1, w2, b2)
    assert out.shape == (batch, dim4)
    assert jnp.allclose(out, ref, atol=1e-3, rtol=1e-3), "mismatch (packed generic head)"

    # Case 2: batch not divisible by the packing factor -> plain fallback path
    # with a partial (unpadded) final input block.
    b_odd = 19
    x1o = jax.random.normal(kx1o, (b_odd, dim1), dtype=jnp.float32)
    x2o = jax.random.normal(kx2o, (b_odd, dim2), dtype=jnp.float32)
    out_o = jax.block_until_ready(merge_forward(x1o, x2o, w1, b1, w2, b2))
    ref_o = reference_forward(x1o, x2o, w1, b1, w2, b2)
    assert out_o.shape == (b_odd, dim4)
    assert jnp.allclose(out_o, ref_o, atol=1e-3, rtol=1e-3), "mismatch (plain generic head)"

    # Case 3: scalar head (dim4=1, TGAT affinity score) -> MXU NT contraction +
    # lane-dense f32[B] output.
    w2h = xavier_normal(kw2h, dim3, 1)
    b2h = uniform_bias(kb2h, dim3, 1)
    out_h = jax.block_until_ready(merge_forward(x1, x2, w1, b1, w2h, b2h))
    ref_h = reference_forward(x1, x2, w1, b1, w2h, b2h)
    assert out_h.shape == (batch, 1)
    assert jnp.allclose(out_h, ref_h, atol=1e-3, rtol=1e-3), "mismatch (scalar head)"

    # Case 4: bf16 activations from the producer (no wrapper-side astype of f32
    # activations; the compute dtype follows the input dtype).
    x1b = x1.astype(jnp.bfloat16)
    x2b = x2.astype(jnp.bfloat16)
    out_b = jax.block_until_ready(merge_forward(x1b, x2b, w1, b1, w2, b2))
    w1r = w1.astype(jnp.bfloat16).astype(jnp.float32)
    w2r = w2.astype(jnp.bfloat16).astype(jnp.float32)
    ref_b = reference_forward(x1b.astype(jnp.float32), x2b.astype(jnp.float32),
                              w1r, b1, w2r, b2)
    assert out_b.shape == (batch, dim4)
    assert jnp.allclose(out_b, ref_b, atol=2e-2, rtol=2e-2), "mismatch (bf16 inputs)"

    print("KERNEL_OK")
</pallas_src>

<mosaic_0001>
module attributes {stable_mosaic.version = 11 : i64} {
  func.func @merge_kernel(%arg0: i32, %arg1: memref<32x128xf32, #tpu.memory_space<vmem>>, %arg2: memref<32x128xf32, #tpu.memory_space<vmem>>, %arg3: memref<128x256xf32, #tpu.memory_space<vmem>>, %arg4: memref<128x256xf32, #tpu.memory_space<vmem>>, %arg5: memref<1x256xf32, #tpu.memory_space<vmem>>, %arg6: memref<256x128xf32, #tpu.memory_space<vmem>>, %arg7: memref<1x128xf32, #tpu.memory_space<vmem>>, %arg8: memref<32x128xf32, #tpu.memory_space<vmem>>) attributes {dimension_semantics = [#tpu.dimension_semantics<parallel>], iteration_bounds = array<i64: 1>, scalar_prefetch = 0 : i64, scratch_operands = 0 : i64, tpu.core_type = #tpu.core_type<tc>, window_params = [{transform_indices = @transform_0, window_bounds = array<i64: 32, 128>}, {transform_indices = @transform_1, window_bounds = array<i64: 32, 128>}, {pipeline_mode = #tpu.pipeline_mode<synchronous>, transform_indices = @transform_2, window_bounds = array<i64: 128, 256>}, {pipeline_mode = #tpu.pipeline_mode<synchronous>, transform_indices = @transform_3, window_bounds = array<i64: 128, 256>}, {pipeline_mode = #tpu.pipeline_mode<synchronous>, transform_indices = @transform_4, window_bounds = array<i64: 1, 256>}, {pipeline_mode = #tpu.pipeline_mode<synchronous>, transform_indices = @transform_5, window_bounds = array<i64: 256, 128>}, {pipeline_mode = #tpu.pipeline_mode<synchronous>, transform_indices = @transform_6, window_bounds = array<i64: 1, 128>}, {transform_indices = @transform_7, window_bounds = array<i64: 32, 128>}]} {
    %c0 = arith.constant 0 : index
    %c0_0 = arith.constant 0 : index
    %0 = vector.load %arg1[%c0, %c0_0] : memref<32x128xf32, #tpu.memory_space<vmem>>, vector<32x128xf32>
    %c0_1 = arith.constant 0 : index
    %c0_2 = arith.constant 0 : index
    %1 = vector.load %arg3[%c0_1, %c0_2] : memref<128x256xf32, #tpu.memory_space<vmem>>, vector<128x256xf32>
    %cst = arith.constant dense<0.000000e+00> : vector<32x256xf32>
    %2 = tpu.matmul %0, %1, %cst {dimension_numbers = #tpu.dot_dimension_numbers<[1], [0], [0], [1], [0, 0, 1, 1], [], []>} : vector<32x128xf32>, vector<128x256xf32>, vector<32x256xf32> -> vector<32x256xf32>
    %c0_3 = arith.constant 0 : index
    %c0_4 = arith.constant 0 : index
    %3 = vector.load %arg2[%c0_3, %c0_4] : memref<32x128xf32, #tpu.memory_space<vmem>>, vector<32x128xf32>
    %c0_5 = arith.constant 0 : index
    %c0_6 = arith.constant 0 : index
    %4 = vector.load %arg4[%c0_5, %c0_6] : memref<128x256xf32, #tpu.memory_space<vmem>>, vector<128x256xf32>
    %cst_7 = arith.constant dense<0.000000e+00> : vector<32x256xf32>
    %5 = tpu.matmul %3, %4, %cst_7 {dimension_numbers = #tpu.dot_dimension_numbers<[1], [0], [0], [1], [0, 0, 1, 1], [], []>} : vector<32x128xf32>, vector<128x256xf32>, vector<32x256xf32> -> vector<32x256xf32>
    %6 = arith.addf %2, %5 : vector<32x256xf32>
    %c0_8 = arith.constant 0 : index
    %c0_9 = arith.constant 0 : index
    %7 = vector.load %arg5[%c0_8, %c0_9] : memref<1x256xf32, #tpu.memory_space<vmem>>, vector<1x256xf32>
    %8 = vector.broadcast %7 : vector<1x256xf32> to vector<32x256xf32>
    %9 = arith.addf %6, %8 : vector<32x256xf32>
    %cst_10 = arith.constant 0.000000e+00 : f32
    %10 = vector.broadcast %cst_10 : f32 to vector<32x256xf32>
    %11 = arith.maximumf %9, %10 : vector<32x256xf32>
    %c0_11 = arith.constant 0 : index
    %c0_12 = arith.constant 0 : index
    %12 = vector.load %arg6[%c0_11, %c0_12] : memref<256x128xf32, #tpu.memory_space<vmem>>, vector<256x128xf32>
    %cst_13 = arith.constant dense<0.000000e+00> : vector<32x128xf32>
    %13 = tpu.matmul %11, %12, %cst_13 {dimension_numbers = #tpu.dot_dimension_numbers<[1], [0], [0], [1], [0, 0, 1, 1], [], []>} : vector<32x256xf32>, vector<256x128xf32>, vector<32x128xf32> -> vector<32x128xf32>
    %c0_14 = arith.constant 0 : index
    %c0_15 = arith.constant 0 : index
    %14 = vector.load %arg7[%c0_14, %c0_15] : memref<1x128xf32, #tpu.memory_space<vmem>>, vector<1x128xf32>
    %15 = vector.broadcast %14 : vector<1x128xf32> to vector<32x128xf32>
    %16 = arith.addf %13, %15 : vector<32x128xf32>
    %c0_16 = arith.constant 0 : index
    %c0_17 = arith.constant 0 : index
    %17 = vector.load %arg8[%c0_16, %c0_17] : memref<32x128xf32, #tpu.memory_space<vmem>>, vector<32x128xf32>
    tpu.vector_store %arg8[%c0_16, %c0_17], %16 {strides = array<i32>} : memref<32x128xf32, #tpu.memory_space<vmem>>, vector<32x128xf32>,
    return
  }
  func.func @transform_0(%arg0: i32) -> (i32, i32) {
    %c0_i32 = arith.constant 0 : i32
    %c0_i32_0 = arith.constant 0 : i32
    return %arg0, %c0_i32 : i32, i32
  }
  func.func @transform_1(%arg0: i32) -> (i32, i32) {
    %c0_i32 = arith.constant 0 : i32
    %c0_i32_0 = arith.constant 0 : i32
    return %arg0, %c0_i32 : i32, i32
  }
  func.func @transform_2(%arg0: i32) -> (i32, i32) {
    %c0_i32 = arith.constant 0 : i32
    %c0_i32_0 = arith.constant 0 : i32
    %c0_i32_1 = arith.constant 0 : i32
    return %c0_i32, %c0_i32_0 : i32, i32
  }
  func.func @transform_3(%arg0: i32) -> (i32, i32) {
    %c0_i32 = arith.constant 0 : i32
    %c0_i32_0 = arith.constant 0 : i32
    %c0_i32_1 = arith.constant 0 : i32
    return %c0_i32, %c0_i32_0 : i32, i32
  }
  func.func @transform_4(%arg0: i32) -> (i32, i32) {
    %c0_i32 = arith.constant 0 : i32
    %c0_i32_0 = arith.constant 0 : i32
    %c0_i32_1 = arith.constant 0 : i32
    return %c0_i32, %c0_i32_0 : i32, i32
  }
  func.func @transform_5(%arg0: i32) -> (i32, i32) {
    %c0_i32 = arith.constant 0 : i32
    %c0_i32_0 = arith.constant 0 : i32
    %c0_i32_1 = arith.constant 0 : i32
    return %c0_i32, %c0_i32_0 : i32, i32
  }
  func.func @transform_6(%arg0: i32) -> (i32, i32) {
    %c0_i32 = arith.constant 0 : i32
    %c0_i32_0 = arith.constant 0 : i32
    %c0_i32_1 = arith.constant 0 : i32
    return %c0_i32, %c0_i32_0 : i32, i32
  }
  func.func @transform_7(%arg0: i32) -> (i32, i32) {
    %c0_i32 = arith.constant 0 : i32
    %c0_i32_0 = arith.constant 0 : i32
    return %arg0, %c0_i32 : i32, i32
  }
}

</mosaic_0001>

<llo_original>
// kernel: merge_forward.1
$region0: #{merge_forward.1}
  #allocation0 [shape = 'u32[]', space=smem, size = 0x4, offset = 0x4, fixed_abs, tag = 'smem constant byte address 0x4 - core index']
  #allocation1 [shape = 'u32[144,128]{1,0:T(1,128)}', space=vmem, size = 0x12000, scoped, tag = 'internal scratch']
  %s0 = inlined_call_operand.vmem [shape: f32[4,128], index: 0, kind: input, shape index: {}]
  %s1 = inlined_call_operand.vmem [shape: f32[4,128], index: 1, kind: input, shape index: {}]
  %s2 = inlined_call_operand.vmem [shape: f32[128,256], index: 2, kind: input, shape index: {}]
  %s3 = inlined_call_operand.vmem [shape: f32[128,256], index: 3, kind: input, shape index: {}]
  %s4 = inlined_call_operand.vmem [shape: f32[1,256], index: 4, kind: input, shape index: {}]
  %s5 = inlined_call_operand.vmem [shape: f32[256,128], index: 5, kind: input, shape index: {}]
  %s6 = inlined_call_operand.vmem [shape: f32[1,128], index: 6, kind: input, shape index: {}]
  %s7 = inlined_call_operand.vmem [shape: f32[32,128], index: 7, kind: output, shape index: {}]
  %s8 = sld [smem:[#allocation0]]
  $region38: #{merge_forward.1} parent=0
    _
  %s10 = ssub.s32 1, %s8
  %s11 = scalar_select 0, %s10, %s8
  // Predicated region
  $region2: #{merge_forward.1} parent=0 // pred_check
    _
  $region3: #{merge_forward.1} parent=0 // pred_check_branch
    %13 = sbr.rel (0) target = $region5
  $region4: #{merge_forward.1} parent=0 // pred_region
    _
  $region5: #{merge_forward.1} parent=0 // pred_fallthru
    _
  // Predicated region
  $region6: #{merge_forward.1} parent=0 // pred_check
    _
  $region7: #{merge_forward.1} parent=0 // pred_check_branch
    %15 = sbr.rel (0) target = $region9
  $region8: #{merge_forward.1} parent=0 // pred_region
    _
  $region9: #{merge_forward.1} parent=0 // pred_fallthru
    _
  // Predicated region
  $region10: #{merge_forward.1} parent=0 // pred_check
    _
  $region11: #{merge_forward.1} parent=0 // pred_check_branch
    %17 = sbr.rel (0) target = $region13
  $region12: #{merge_forward.1} parent=0 // pred_region
    _
  $region13: #{merge_forward.1} parent=0 // pred_fallthru
    _
  // Predicated region
  $region14: #{merge_forward.1} parent=0 // pred_check
    _
  $region15: #{merge_forward.1} parent=0 // pred_check_branch
    %19 = sbr.rel (0) target = $region17
  $region16: #{merge_forward.1} parent=0 // pred_region
    _
  $region17: #{merge_forward.1} parent=0 // pred_fallthru
    _
  // Predicated region
  $region18: #{merge_forward.1} parent=0 // pred_check
    _
  $region19: #{merge_forward.1} parent=0 // pred_check_branch
    %21 = sbr.rel (0) target = $region21
  $region20: #{merge_forward.1} parent=0 // pred_region
    _
  $region21: #{merge_forward.1} parent=0 // pred_fallthru
    _
  // Predicated region
  $region22: #{merge_forward.1} parent=0 // pred_check
    _
  $region23: #{merge_forward.1} parent=0 // pred_check_branch
    %23 = sbr.rel (0) target = $region25
  $region24: #{merge_forward.1} parent=0 // pred_region
    _
  $region25: #{merge_forward.1} parent=0 // pred_fallthru
    _
  // Predicated region
  $region26: #{merge_forward.1} parent=0 // pred_check
    _
  $region27: #{merge_forward.1} parent=0 // pred_check_branch
    %25 = sbr.rel (0) target = $region29
  $region28: #{merge_forward.1} parent=0 // pred_region
    _
  $region29: #{merge_forward.1} parent=0 // pred_fallthru
    _
  %v26 = vld [vmem:[%s0] sm:$0xff]
  %v27 = vld [vmem:[%s0 + $0x8] sm:$0xff]
  %v28 = vld [vmem:[%s0 + $0x10] sm:$0xff]
  %v29 = vld [vmem:[%s0 + $0x18] sm:$0xff]
  %v30 = vld [vmem:[%s2] sm:$0xff]
  %v31 = vld [vmem:[%s2 + $0x8] sm:$0xff]
  %v32 = vld [vmem:[%s2 + $0x10] sm:$0xff]
  %v33 = vld [vmem:[%s2 + $0x18] sm:$0xff]
  %v34 = vld [vmem:[%s2 + $0x20] sm:$0xff]
  %v35 = vld [vmem:[%s2 + $0x28] sm:$0xff]
  %v36 = vld [vmem:[%s2 + $0x30] sm:$0xff]
  %v37 = vld [vmem:[%s2 + $0x38] sm:$0xff]
  %v38 = vld [vmem:[%s2 + $0x40] sm:$0xff]
  %v39 = vld [vmem:[%s2 + $0x48] sm:$0xff]
  %v40 = vld [vmem:[%s2 + $0x50] sm:$0xff]
  %v41 = vld [vmem:[%s2 + $0x58] sm:$0xff]
  %v42 = vld [vmem:[%s2 + $0x60] sm:$0xff]
  %v43 = vld [vmem:[%s2 + $0x68] sm:$0xff]
  %v44 = vld [vmem:[%s2 + $0x70] sm:$0xff]
  %v45 = vld [vmem:[%s2 + $0x78] sm:$0xff]
  %v46 = vld [vmem:[%s2 + $0x80] sm:$0xff]
  %v47 = vld [vmem:[%s2 + $0x88] sm:$0xff]
  %v48 = vld [vmem:[%s2 + $0x90] sm:$0xff]
  %v49 = vld [vmem:[%s2 + $0x98] sm:$0xff]
  %v50 = vld [vmem:[%s2 + $0xa0] sm:$0xff]
  %v51 = vld [vmem:[%s2 + $0xa8] sm:$0xff]
  %v52 = vld [vmem:[%s2 + $0xb0] sm:$0xff]
  %v53 = vld [vmem:[%s2 + $0xb8] sm:$0xff]
  %v54 = vld [vmem:[%s2 + $0xc0] sm:$0xff]
  %v55 = vld [vmem:[%s2 + $0xc8] sm:$0xff]
  %v56 = vld [vmem:[%s2 + $0xd0] sm:$0xff]
  %v57 = vld [vmem:[%s2 + $0xd8] sm:$0xff]
  %v58 = vld [vmem:[%s2 + $0xe0] sm:$0xff]
  %v59 = vld [vmem:[%s2 + $0xe8] sm:$0xff]
  %v60 = vld [vmem:[%s2 + $0xf0] sm:$0xff]
  %v61 = vld [vmem:[%s2 + $0xf8] sm:$0xff]
  %v62 = vld [vmem:[%s1] sm:$0xff]
  %v63 = vld [vmem:[%s1 + $0x8] sm:$0xff]
  %v64 = vld [vmem:[%s1 + $0x10] sm:$0xff]
  %v65 = vld [vmem:[%s1 + $0x18] sm:$0xff]
  %v66 = vld [vmem:[%s3] sm:$0xff]
  %v67 = vld [vmem:[%s3 + $0x8] sm:$0xff]
  %v68 = vld [vmem:[%s3 + $0x10] sm:$0xff]
  %v69 = vld [vmem:[%s3 + $0x18] sm:$0xff]
  %v70 = vld [vmem:[%s3 + $0x20] sm:$0xff]
  %v71 = vld [vmem:[%s3 + $0x28] sm:$0xff]
  %v72 = vld [vmem:[%s3 + $0x30] sm:$0xff]
  %v73 = vld [vmem:[%s3 + $0x38] sm:$0xff]
  %v74 = vld [vmem:[%s3 + $0x40] sm:$0xff]
  %v75 = vld [vmem:[%s3 + $0x48] sm:$0xff]
  %v76 = vld [vmem:[%s3 + $0x50] sm:$0xff]
  %v77 = vld [vmem:[%s3 + $0x58] sm:$0xff]
  %v78 = vld [vmem:[%s3 + $0x60] sm:$0xff]
  %v79 = vld [vmem:[%s3 + $0x68] sm:$0xff]
  %v80 = vld [vmem:[%s3 + $0x70] sm:$0xff]
  %v81 = vld [vmem:[%s3 + $0x78] sm:$0xff]
  %v82 = vld [vmem:[%s3 + $0x80] sm:$0xff]
  %v83 = vld [vmem:[%s3 + $0x88] sm:$0xff]
  %v84 = vld [vmem:[%s3 + $0x90] sm:$0xff]
  %v85 = vld [vmem:[%s3 + $0x98] sm:$0xff]
  %v86 = vld [vmem:[%s3 + $0xa0] sm:$0xff]
  %v87 = vld [vmem:[%s3 + $0xa8] sm:$0xff]
  %v88 = vld [vmem:[%s3 + $0xb0] sm:$0xff]
  %v89 = vld [vmem:[%s3 + $0xb8] sm:$0xff]
  %v90 = vld [vmem:[%s3 + $0xc0] sm:$0xff]
  %v91 = vld [vmem:[%s3 + $0xc8] sm:$0xff]
  %v92 = vld [vmem:[%s3 + $0xd0] sm:$0xff]
  %v93 = vld [vmem:[%s3 + $0xd8] sm:$0xff]
  %v94 = vld [vmem:[%s3 + $0xe0] sm:$0xff]
  %v95 = vld [vmem:[%s3 + $0xe8] sm:$0xff]
  %v96 = vld [vmem:[%s3 + $0xf0] sm:$0xff]
  %v97 = vld [vmem:[%s3 + $0xf8] sm:$0xff]
  %98 = vmatprep.subr.mxu0 %v67
  %99 = vmatpush1.msra.mxu0 %v66
  %100 = vmatprep.subr.mxu0 %v69
  %101 = vmatpush1.msra.mxu0 %v68
  %102 = vmatprep.subr.mxu0 %v71
  %103 = vmatpush1.msra.mxu0 %v70
  %104 = vmatprep.subr.mxu0 %v73
  %105 = vmatpush1.msra.mxu0 %v72
  %106 = vmatprep.subr.mxu0 %v75
  %107 = vmatpush1.msra.mxu0 %v74
  %108 = vmatprep.subr.mxu0 %v77
  %109 = vmatpush1.msra.mxu0 %v76
  %110 = vmatprep.subr.mxu0 %v79
  %111 = vmatpush1.msra.mxu0 %v78
  %112 = vmatprep.subr.mxu0 %v81
  %113 = vmatpush1.msra.mxu0 %v80
  %114 = vmatprep.subr.mxu0 %v83
  %115 = vmatpush1.msra.mxu0 %v82
  %116 = vmatprep.subr.mxu0 %v85
  %117 = vmatpush1.msra.mxu0 %v84
  %118 = vmatprep.subr.mxu0 %v87
  %119 = vmatpush1.msra.mxu0 %v86
  %120 = vmatprep.subr.mxu0 %v89
  %121 = vmatpush1.msra.mxu0 %v88
  %122 = vmatprep.subr.mxu0 %v91
  %123 = vmatpush1.msra.mxu0 %v90
  %124 = vmatprep.subr.mxu0 %v93
  %125 = vmatpush1.msra.mxu0 %v92
  %126 = vmatprep.subr.mxu0 %v95
  %127 = vmatpush1.msra.mxu0 %v94
  %128 = vmatprep.subr.mxu0 %v97
  %129 = vmatpush1.msra.mxu0 %v96
  %130 = vmatprep.subr.mxu0 0.0
  %131 = vmatpush1.msra.mxu0 0.0
  %132 = vmatprep.subr.mxu0 0.0
  %133 = vmatpush1.msra.mxu0 0.0
  %134 = vmatprep.subr.mxu0 0.0
  %135 = vmatpush1.msra.mxu0 0.0
  %136 = vmatprep.subr.mxu0 0.0
  %137 = vmatpush1.msra.mxu0 0.0
  %138 = vmatprep.subr.mxu0 0.0
  %139 = vmatpush1.msra.mxu0 0.0
  %140 = vmatprep.subr.mxu0 0.0
  %141 = vmatpush1.msra.mxu0 0.0
  %142 = vmatprep.subr.mxu0 0.0
  %143 = vmatpush1.msra.mxu0 0.0
  %144 = vmatprep.subr.mxu0 0.0
  %145 = vmatpush1.msra.mxu0 0.0
  %146 = vmatprep.subr.mxu0 0.0
  %147 = vmatpush1.msra.mxu0 0.0
  %148 = vmatprep.subr.mxu0 0.0
  %149 = vmatpush1.msra.mxu0 0.0
  %150 = vmatprep.subr.mxu0 0.0
  %151 = vmatpush1.msra.mxu0 0.0
  %152 = vmatprep.subr.mxu0 0.0
  %153 = vmatpush1.msra.mxu0 0.0
  %154 = vmatprep.subr.mxu0 0.0
  %155 = vmatpush1.msra.mxu0 0.0
  %156 = vmatprep.subr.mxu0 0.0
  %157 = vmatpush1.msra.mxu0 0.0
  %158 = vmatprep.subr.mxu0 0.0
  %159 = vmatpush1.msra.mxu0 0.0
  %160 = vmatprep.subr.mxu0 0.0
  %161 = vmatpush1.msra.mxu0 0.0
  %162 = vmatprep.mubr.f32.mxu0 0.0
  %163 = vmatmul.mubr.f32.gmra.mrb[0].mxu0 %v62
  %v164 = vpop.f32.mrb[0].mxu0
  %v165 = vadd.f32 0.0, %v164
  %v166 = vpop.f32.mrb[0].mxu0
  %v167 = vadd.f32 0.0, %v166
  %168 = vmatprep.mubr.f32.mxu0 0.0
  %169 = vmatmul.mubr.f32.gmra.mrb[0].mxu0 %v63
  %v170 = vpop.f32.mrb[0].mxu0
  %v171 = vadd.f32 0.0, %v170
  %v172 = vpop.f32.mrb[0].mxu0
  %v173 = vadd.f32 0.0, %v172
  %174 = vmatprep.mubr.f32.mxu0 0.0
  %175 = vmatmul.mubr.f32.gmra.mrb[0].mxu0 %v64
  %v176 = vpop.f32.mrb[0].mxu0
  %v177 = vadd.f32 0.0, %v176
  %v178 = vpop.f32.mrb[0].mxu0
  %v179 = vadd.f32 0.0, %v178
  %180 = vmatprep.mubr.f32.mxu0 0.0
  %181 = vmatmul.mubr.f32.gmra.mrb[0].mxu0 %v65
  %v182 = vpop.f32.mrb[0].mxu0
  %v183 = vadd.f32 0.0, %v182
  %v184 = vpop.f32.mrb[0].mxu0
  %v185 = vadd.f32 0.0, %v184
  %186 = vdwg.mxu0
  %187 = vmatprep.subr.mxu0 %v31
  %188 = vmatpush1.msra.mxu0 %v30
  %189 = vmatprep.subr.mxu0 %v33
  %190 = vmatpush1.msra.mxu0 %v32
  %191 = vmatprep.subr.mxu0 %v35
  %192 = vmatpush1.msra.mxu0 %v34
  %193 = vmatprep.subr.mxu0 %v37
  %194 = vmatpush1.msra.mxu0 %v36
  %195 = vmatprep.subr.mxu0 %v39
  %196 = vmatpush1.msra.mxu0 %v38
  %197 = vmatprep.subr.mxu0 %v41
  %198 = vmatpush1.msra.mxu0 %v40
  %199 = vmatprep.subr.mxu0 %v43
  %200 = vmatpush1.msra.mxu0 %v42
  %201 = vmatprep.subr.mxu0 %v45
  %202 = vmatpush1.msra.mxu0 %v44
  %203 = vmatprep.subr.mxu0 %v47
  %204 = vmatpush1.msra.mxu0 %v46
  %205 = vmatprep.subr.mxu0 %v49
  %206 = vmatpush1.msra.mxu0 %v48
  %207 = vmatprep.subr.mxu0 %v51
  %208 = vmatpush1.msra.mxu0 %v50
  %209 = vmatprep.subr.mxu0 %v53
  %210 = vmatpush1.msra.mxu0 %v52
  %211 = vmatprep.subr.mxu0 %v55
  %212 = vmatpush1.msra.mxu0 %v54
  %213 = vmatprep.subr.mxu0 %v57
  %214 = vmatpush1.msra.mxu0 %v56
  %215 = vmatprep.subr.mxu0 %v59
  %216 = vmatpush1.msra.mxu0 %v58
  %217 = vmatprep.subr.mxu0 %v61
  %218 = vmatpush1.msra.mxu0 %v60
  %219 = vmatprep.subr.mxu0 0.0
  %220 = vmatpush1.msra.mxu0 0.0
  %221 = vmatprep.subr.mxu0 0.0
  %222 = vmatpush1.msra.mxu0 0.0
  %223 = vmatprep.subr.mxu0 0.0
  %224 = vmatpush1.msra.mxu0 0.0
  %225 = vmatprep.subr.mxu0 0.0
  %226 = vmatpush1.msra.mxu0 0.0
  %227 = vmatprep.subr.mxu0 0.0
  %228 = vmatpush1.msra.mxu0 0.0
  %229 = vmatprep.subr.mxu0 0.0
  %230 = vmatpush1.msra.mxu0 0.0
  %231 = vmatprep.subr.mxu0 0.0
  %232 = vmatpush1.msra.mxu0 0.0
  %233 = vmatprep.subr.mxu0 0.0
  %234 = vmatpush1.msra.mxu0 0.0
  %235 = vmatprep.subr.mxu0 0.0
  %236 = vmatpush1.msra.mxu0 0.0
  %237 = vmatprep.subr.mxu0 0.0
  %238 = vmatpush1.msra.mxu0 0.0
  %239 = vmatprep.subr.mxu0 0.0
  %240 = vmatpush1.msra.mxu0 0.0
  %241 = vmatprep.subr.mxu0 0.0
  %242 = vmatpush1.msra.mxu0 0.0
  %243 = vmatprep.subr.mxu0 0.0
  %244 = vmatpush1.msra.mxu0 0.0
  %245 = vmatprep.subr.mxu0 0.0
  %246 = vmatpush1.msra.mxu0 0.0
  %247 = vmatprep.subr.mxu0 0.0
  %248 = vmatpush1.msra.mxu0 0.0
  %249 = vmatprep.subr.mxu0 0.0
  %250 = vmatpush1.msra.mxu0 0.0
  %251 = vmatprep.mubr.f32.mxu0 0.0
  %252 = vmatmul.mubr.f32.gmra.mrb[0].mxu0 %v26
  %v253 = vpop.f32.mrb[0].mxu0
  %v254 = vadd.f32 %v165, %v253
  %v255 = vpop.f32.mrb[0].mxu0
  %v256 = vadd.f32 %v167, %v255
  %257 = vmatprep.mubr.f32.mxu0 0.0
  %258 = vmatmul.mubr.f32.gmra.mrb[0].mxu0 %v27
  %v259 = vpop.f32.mrb[0].mxu0
  %v260 = vadd.f32 %v171, %v259
  %v261 = vpop.f32.mrb[0].mxu0
  %v262 = vadd.f32 %v173, %v261
  %263 = vmatprep.mubr.f32.mxu0 0.0
  %264 = vmatmul.mubr.f32.gmra.mrb[0].mxu0 %v28
  %v265 = vpop.f32.mrb[0].mxu0
  %v266 = vadd.f32 %v177, %v265
  %v267 = vpop.f32.mrb[0].mxu0
  %v268 = vadd.f32 %v179, %v267
  %269 = vmatprep.mubr.f32.mxu0 0.0
  %270 = vmatmul.mubr.f32.gmra.mrb[0].mxu0 %v29
  %v271 = vpop.f32.mrb[0].mxu0
  %v272 = vadd.f32 %v183, %v271
  %v273 = vpop.f32.mrb[0].mxu0
  %v274 = vadd.f32 %v185, %v273
  %275 = vdwg.mxu0
  %v276 = vld [vmem:[%s4] sm:$0x3]
  %v278 = vlaneseq
  %v279 = vshrl.u32 %v278, 7
  %v280 = vsub.s32 0, %v279
  %v281 = vrot.slane %v276, %v280
  %v282 = vlaneseq
  %v283 = vshrl.u32 %v282, 7
  %v284 = vsub.s32 1, %v283
  %v285 = vrot.slane %v276, %v284
  %v288 = vadd.f32 %v254, %v281
  %v289 = vadd.f32 %v256, %v285
  %v290 = vadd.f32 %v260, %v281
  %v291 = vadd.f32 %v262, %v285
  %v292 = vadd.f32 %v266, %v281
  %v293 = vadd.f32 %v268, %v285
  %v294 = vadd.f32 %v272, %v281
  %v295 = vadd.f32 %v274, %v285
  %v296 = vmax.f32 %v288, 0.0
  %v297 = vmax.f32 %v289, 0.0
  %v298 = vmax.f32 %v290, 0.0
  %v299 = vmax.f32 %v291, 0.0
  %v300 = vmax.f32 %v292, 0.0
  %v301 = vmax.f32 %v293, 0.0
  %v302 = vmax.f32 %v294, 0.0
  %v303 = vmax.f32 %v295, 0.0
  %v304 = vld [vmem:[%s5] sm:$0xff]
  %v305 = vld [vmem:[%s5 + $0x8] sm:$0xff]
  %v306 = vld [vmem:[%s5 + $0x10] sm:$0xff]
  %v307 = vld [vmem:[%s5 + $0x18] sm:$0xff]
  %v308 = vld [vmem:[%s5 + $0x20] sm:$0xff]
  %v309 = vld [vmem:[%s5 + $0x28] sm:$0xff]
  %v310 = vld [vmem:[%s5 + $0x30] sm:$0xff]
  %v311 = vld [vmem:[%s5 + $0x38] sm:$0xff]
  %v312 = vld [vmem:[%s5 + $0x40] sm:$0xff]
  %v313 = vld [vmem:[%s5 + $0x48] sm:$0xff]
  %v314 = vld [vmem:[%s5 + $0x50] sm:$0xff]
  %v315 = vld [vmem:[%s5 + $0x58] sm:$0xff]
  %v316 = vld [vmem:[%s5 + $0x60] sm:$0xff]
  %v317 = vld [vmem:[%s5 + $0x68] sm:$0xff]
  %v318 = vld [vmem:[%s5 + $0x70] sm:$0xff]
  %v319 = vld [vmem:[%s5 + $0x78] sm:$0xff]
  %v320 = vld [vmem:[%s5 + $0x80] sm:$0xff]
  %v321 = vld [vmem:[%s5 + $0x88] sm:$0xff]
  %v322 = vld [vmem:[%s5 + $0x90] sm:$0xff]
  %v323 = vld [vmem:[%s5 + $0x98] sm:$0xff]
  %v324 = vld [vmem:[%s5 + $0xa0] sm:$0xff]
  %v325 = vld [vmem:[%s5 + $0xa8] sm:$0xff]
  %v326 = vld [vmem:[%s5 + $0xb0] sm:$0xff]
  %v327 = vld [vmem:[%s5 + $0xb8] sm:$0xff]
  %v328 = vld [vmem:[%s5 + $0xc0] sm:$0xff]
  %v329 = vld [vmem:[%s5 + $0xc8] sm:$0xff]
  %v330 = vld [vmem:[%s5 + $0xd0] sm:$0xff]
  %v331 = vld [vmem:[%s5 + $0xd8] sm:$0xff]
  %v332 = vld [vmem:[%s5 + $0xe0] sm:$0xff]
  %v333 = vld [vmem:[%s5 + $0xe8] sm:$0xff]
  %v334 = vld [vmem:[%s5 + $0xf0] sm:$0xff]
  %v335 = vld [vmem:[%s5 + $0xf8] sm:$0xff]
  %v336 = vld [vmem:[%s6] sm:$0x1]
  %v338 = vlaneseq
  %v339 = vshrl.u32 %v338, 7
  %v340 = vsub.s32 0, %v339
  %v341 = vrot.slane %v336, %v340
  %343 = vmatprep.subr.mxu0 0.0
  %344 = vmatpush1.msra.mxu0 %v304
  %345 = vmatprep.subr.mxu0 0.0
  %346 = vmatpush1.msra.mxu0 %v305
  %347 = vmatprep.subr.mxu0 0.0
  %348 = vmatpush1.msra.mxu0 %v306
  %349 = vmatprep.subr.mxu0 0.0
  %350 = vmatpush1.msra.mxu0 %v307
  %351 = vmatprep.subr.mxu0 0.0
  %352 = vmatpush1.msra.mxu0 %v308
  %353 = vmatprep.subr.mxu0 0.0
  %354 = vmatpush1.msra.mxu0 %v309
  %355 = vmatprep.subr.mxu0 0.0
  %356 = vmatpush1.msra.mxu0 %v310
  %357 = vmatprep.subr.mxu0 0.0
  %358 = vmatpush1.msra.mxu0 %v311
  %359 = vmatprep.subr.mxu0 0.0
  %360 = vmatpush1.msra.mxu0 %v312
  %361 = vmatprep.subr.mxu0 0.0
  %362 = vmatpush1.msra.mxu0 %v313
  %363 = vmatprep.subr.mxu0 0.0
  %364 = vmatpush1.msra.mxu0 %v314
  %365 = vmatprep.subr.mxu0 0.0
  %366 = vmatpush1.msra.mxu0 %v315
  %367 = vmatprep.subr.mxu0 0.0
  %368 = vmatpush1.msra.mxu0 %v316
  %369 = vmatprep.subr.mxu0 0.0
  %370 = vmatpush1.msra.mxu0 %v317
  %371 = vmatprep.subr.mxu0 0.0
  %372 = vmatpush1.msra.mxu0 %v318
  %373 = vmatprep.subr.mxu0 0.0
  %374 = vmatpush1.msra.mxu0 %v319
  %375 = vmatprep.subr.mxu0 0.0
  %376 = vmatpush1.msra.mxu0 %v320
  %377 = vmatprep.subr.mxu0 0.0
  %378 = vmatpush1.msra.mxu0 %v321
  %379 = vmatprep.subr.mxu0 0.0
  %380 = vmatpush1.msra.mxu0 %v322
  %381 = vmatprep.subr.mxu0 0.0
  %382 = vmatpush1.msra.mxu0 %v323
  %383 = vmatprep.subr.mxu0 0.0
  %384 = vmatpush1.msra.mxu0 %v324
  %385 = vmatprep.subr.mxu0 0.0
  %386 = vmatpush1.msra.mxu0 %v325
  %387 = vmatprep.subr.mxu0 0.0
  %388 = vmatpush1.msra.mxu0 %v326
  %389 = vmatprep.subr.mxu0 0.0
  %390 = vmatpush1.msra.mxu0 %v327
  %391 = vmatprep.subr.mxu0 0.0
  %392 = vmatpush1.msra.mxu0 %v328
  %393 = vmatprep.subr.mxu0 0.0
  %394 = vmatpush1.msra.mxu0 %v329
  %395 = vmatprep.subr.mxu0 0.0
  %396 = vmatpush1.msra.mxu0 %v330
  %397 = vmatprep.subr.mxu0 0.0
  %398 = vmatpush1.msra.mxu0 %v331
  %399 = vmatprep.subr.mxu0 0.0
  %400 = vmatpush1.msra.mxu0 %v332
  %401 = vmatprep.subr.mxu0 0.0
  %402 = vmatpush1.msra.mxu0 %v333
  %403 = vmatprep.subr.mxu0 0.0
  %404 = vmatpush1.msra.mxu0 %v334
  %405 = vmatprep.subr.mxu0 0.0
  %406 = vmatpush1.msra.mxu0 %v335
  %407 = vmatprep.mubr.f32.mxu0 %v297
  %408 = vmatmul.mubr.f32.gmra.mrb[0].mxu0 %v296
  %v409 = vpop.f32.mrb[0].mxu0
  %v410 = vadd.f32 %v341, %v409
  %v411 = vpop.f32.mrb[0].mxu0
  %412 = vmatprep.mubr.f32.mxu0 %v299
  %413 = vmatmul.mubr.f32.gmra.mrb[0].mxu0 %v298
  %v414 = vpop.f32.mrb[0].mxu0
  %v415 = vadd.f32 %v341, %v414
  %v416 = vpop.f32.mrb[0].mxu0
  %417 = vmatprep.mubr.f32.mxu0 %v301
  %418 = vmatmul.mubr.f32.gmra.mrb[0].mxu0 %v300
  %v419 = vpop.f32.mrb[0].mxu0
  %v420 = vadd.f32 %v341, %v419
  %v421 = vpop.f32.mrb[0].mxu0
  %422 = vmatprep.mubr.f32.mxu0 %v303
  %423 = vmatmul.mubr.f32.gmra.mrb[0].mxu0 %v302
  %v424 = vpop.f32.mrb[0].mxu0
  %v425 = vadd.f32 %v341, %v424
  %v426 = vpop.f32.mrb[0].mxu0
  %427 = vdwg.mxu0
  %428 = vst [vmem:[%s7] sm:$0xff] %v410
  %429 = vst [vmem:[%s7 + $0x8] sm:$0xff] %v415
  %430 = vst [vmem:[%s7 + $0x10] sm:$0xff] %v420
  %431 = vst [vmem:[%s7 + $0x18] sm:$0xff] %v425
  // Predicated region
  $region30: #{merge_forward.1} parent=0 // pred_check
    _
  $region31: #{merge_forward.1} parent=0 // pred_check_branch
    %433 = sbr.rel (0) target = $region33
  $region32: #{merge_forward.1} parent=0 // pred_region
    _
  $region33: #{merge_forward.1} parent=0 // pred_fallthru
    _
  // Predicated region
  $region34: #{merge_forward.1} parent=0 // pred_check
    _
  $region35: #{merge_forward.1} parent=0 // pred_check_branch
    %435 = sbr.rel (0) target = $region37
  $region36: #{merge_forward.1} parent=0 // pred_region
    _
  $region37: #{merge_forward.1} parent=0 // pred_fallthru
    _

</llo_original>
